<compile_context>
chip_gen: v5e
topology: v5e:2x2
jax: 0.10.0
libtpu: 0.0.40
codegen_flags: <defaults>
</compile_context>

<pallas_src>
import functools

import jax
import jax.numpy as jnp
import numpy as np
from jax.experimental import pallas as pl
from jax.experimental.pallas import tpu as pltpu

EPS = 1e-5      # PyTorch BatchNorm2d default
LANES = 128     # TPU vreg lane width


def _residual_block_kernel(x_ref,
                           band1_ref, g1_ref, be1_ref,
                           band2_ref, g2_ref, be2_ref,
                           out_ref, *, channels, rows_per_sample):
    nh2, lanes = x_ref.shape              # (N * H/rows, 128)
    h2 = rows_per_sample                  # packed rows per sample
    inv_m = 1.0 / float(nh2 * (lanes // channels))   # 1 / (N*H*W)

    # Per-sample boundary masks for the sublane shifts (built once, reused by
    # both convs).  Row p's "previous" row is invalid at the first packed row
    # of a sample, its "next" row is invalid at the last packed row.
    ridx = jax.lax.broadcasted_iota(jnp.int32, (nh2, lanes), 0)
    rin = ridx % h2
    first_row = rin == 0
    last_row = rin == h2 - 1

    def conv3x3(v, band):
        # v: (nh2, 128) f32 slab, lane layout j*W*C + w*C + c.
        # 3x3 'SAME' conv == ONE (nh2, 384) x (384, 128) MXU matmul: the 3x3
        # taps, the W-boundary and the row packing are baked into the band
        # matrix; the H-shifted operands come from XLU sublane rolls + masks
        # (no scratch, no misaligned slices), and the bf16 cast happens once
        # on the widened LHS.  Conv bias intentionally omitted (cancelled by
        # the training-mode BN mean subtraction that follows).
        up = jnp.where(first_row, 0.0, pltpu.roll(v, 1, 0))          # row p-1
        down = jnp.where(last_row, 0.0, pltpu.roll(v, nh2 - 1, 0))   # row p+1
        lhs = jnp.concatenate([up, v, down], axis=-1)                # (nh2, 384)
        return jnp.dot(lhs.astype(jnp.bfloat16), band,
                       preferred_element_type=jnp.float32)           # f32 acc

    def lane_fold(row):
        # (1, 128) per-lane partial sums -> every lane holds its channel total
        # (log2(128/C) XLU lane rolls; XLU slots are otherwise idle here).
        step = channels
        while step < lanes:
            row = row + pltpu.roll(row, step, 1)
            step *= 2
        return row

    def bn_scale_shift(y, g_ref, be_ref):
        # Training-mode BatchNorm (batch statistics).  Two-pass / centered
        # variance to avoid E[x^2]-(E[x])^2 cancellation.
        mean = lane_fold(jnp.sum(y, axis=0, keepdims=True)) * inv_m   # (1,128)
        d = y - mean
        var = lane_fold(jnp.sum(d * d, axis=0, keepdims=True)) * inv_m
        scale = g_ref[...] * jax.lax.rsqrt(var + EPS)
        return scale, be_ref[...] - mean * scale

    xv = x_ref[...]                       # f32 slab; also the residual

    # ---- conv1 -> bn1 -> relu --------------------------------------------
    y1 = conv3x3(xv, band1_ref[...])
    sc1, sh1 = bn_scale_shift(y1, g1_ref, be1_ref)
    h1 = jnp.maximum(y1 * sc1 + sh1, 0.0)

    # ---- conv2 -> bn2 -> +residual -> relu (lane-dense unmasked store) ----
    y2 = conv3x3(h1, band2_ref[...])
    sc2, sh2 = bn_scale_shift(y2, g2_ref, be2_ref)
    out_ref[...] = jnp.maximum(y2 * sc2 + sh2 + xv, 0.0)


def _band_matrices(w_oihw, W, C, rows):
    """(C,C,3,3) conv weight -> (384, 128) K-concatenated row-band matrix.

    Block dq of the K axis maps packed input row p+dq-1 to its contribution to
    packed output row p; 3x3 taps, SAME W-boundary and the row packing are
    baked in via static placement tensors.  Built host-side with numpy, ONCE.
    """
    wc = W * C
    p_w = np.zeros((3, W, W), np.float32)                  # dw, w_in, w_out
    for dw in range(3):
        for w_out in range(W):
            w_in = w_out + dw - 1
            if 0 <= w_in < W:
                p_w[dw, w_in, w_out] = 1.0
    # b[dh, w_in*C+ci, w_out*C+co] = w[co, ci, dh, dw]
    b = np.einsum('oihd,dxy->hxiyo', np.asarray(w_oihw, np.float32), p_w)
    b = b.reshape(3, wc, wc)
    p_r = np.zeros((3, rows, rows, 3), np.float32)         # dq, j_in, j_out, dh
    for dq in range(3):
        for j_in in range(rows):
            for j_out in range(rows):
                dh = rows * (dq - 1) + j_in - j_out + 1
                if 0 <= dh < 3:
                    p_r[dq, j_in, j_out, dh] = 1.0
    bb = np.einsum('qabh,hmn->qambn', p_r, b).reshape(3 * LANES, LANES)
    return jnp.asarray(bb, jnp.bfloat16)                   # MXU operand


def pack_params(params, *, H, W, C):
    """Host-side weight packing.  Call ONCE, outside the jitted forward."""
    wc = W * C
    assert LANES % wc == 0, "W*C must divide 128 (toy-shape specialization)"
    rows = LANES // wc
    assert H % rows == 0, "H must be divisible by the row-packing factor"
    assert LANES % C == 0 and ((LANES // C) & (LANES // C - 1)) == 0, \
        "channels must be a power of two"

    def lane_tiled(v):    # per-channel (C,) -> per-lane (1, 128)
        return jnp.tile(jnp.asarray(v, jnp.float32).reshape(1, C),
                        (1, LANES // C))

    # NOTE: conv biases are dropped on purpose — a per-channel constant bias
    # is exactly cancelled by the training-mode BatchNorm mean subtraction.
    return (_band_matrices(params["conv1_w"], W, C, rows),
            lane_tiled(params["bn1_g"]), lane_tiled(params["bn1_b"]),
            _band_matrices(params["conv2_w"], W, C, rows),
            lane_tiled(params["bn2_g"]), lane_tiled(params["bn2_b"]))


@jax.jit
def residual_block(x_nchw, packed):
    """NCHW float32 in/out; matches ResidualBlock.forward (training-mode BN)."""
    N, C, H, W = x_nchw.shape
    wc = W * C
    assert LANES % wc == 0 and H % (LANES // wc) == 0
    rows = LANES // wc
    h2 = H // rows
    nh2 = N * h2

    # Layout plumbing: NCHW -> NHWC -> lane-dense packed rows (nh2, 128).
    x = jnp.transpose(x_nchw, (0, 2, 3, 1)).astype(jnp.float32)
    xp = x.reshape(nh2, LANES)            # also serves as the residual

    band1, g1, be1, band2, g2, be2 = packed
    args = (xp, band1, g1, be1, band2, g2, be2)

    vmem = pl.BlockSpec(memory_space=pltpu.MemorySpace.VMEM)
    out_bytes = nh2 * LANES * 4
    cost = pl.CostEstimate(
        flops=2 * 2 * nh2 * (3 * LANES) * LANES,       # 2 convs, 1 K=384 dot each
        transcendentals=2 * LANES,                      # two rsqrt rows
        bytes_accessed=sum(int(a.size) * a.dtype.itemsize for a in args)
        + out_bytes)

    out = pl.pallas_call(
        functools.partial(_residual_block_kernel, channels=C,
                          rows_per_sample=h2),
        out_shape=jax.ShapeDtypeStruct((nh2, LANES), jnp.float32),
        in_specs=[vmem] * len(args),
        out_specs=vmem,
        compiler_params=pltpu.CompilerParams(vmem_limit_bytes=32 * 1024 * 1024),
        cost_estimate=cost,
    )(*args)

    return jnp.transpose(out.reshape(N, H, W, C), (0, 3, 1, 2))   # NHWC -> NCHW


def reference_forward(x, p):
    # pure-JAX (f32) reference of the PyTorch forward (NCHW, training-mode BN).
    dn = ("NCHW", "OIHW", "NCHW")

    def conv(y, w, b):
        z = jax.lax.conv_general_dilated(y, w, (1, 1), "SAME",
                                         dimension_numbers=dn)
        return z + b[None, :, None, None]

    def bn(y, g, be):
        m = jnp.mean(y, axis=(0, 2, 3), keepdims=True)
        v = jnp.mean((y - m) ** 2, axis=(0, 2, 3), keepdims=True)
        return (y - m) / jnp.sqrt(v + EPS) * g[None, :, None, None] \
            + be[None, :, None, None]

    h = jax.nn.relu(bn(conv(x, p["conv1_w"], p["conv1_b"]), p["bn1_g"], p["bn1_b"]))
    h = bn(conv(h, p["conv2_w"], p["conv2_b"]), p["bn2_g"], p["bn2_b"])
    return jax.nn.relu(h + x)


if __name__ == "__main__":
    N, C, H, W = 2, 4, 16, 16
    key = jax.random.PRNGKey(0)
    ks = jax.random.split(key, 9)

    params = {
        "conv1_w": 0.2 * jax.random.normal(ks[0], (C, C, 3, 3), jnp.float32),
        "conv1_b": 0.1 * jax.random.normal(ks[1], (C,), jnp.float32),
        "bn1_g": 1.0 + 0.1 * jax.random.normal(ks[2], (C,), jnp.float32),
        "bn1_b": 0.1 * jax.random.normal(ks[3], (C,), jnp.float32),
        "conv2_w": 0.2 * jax.random.normal(ks[4], (C, C, 3, 3), jnp.float32),
        "conv2_b": 0.1 * jax.random.normal(ks[5], (C,), jnp.float32),
        "bn2_g": 1.0 + 0.1 * jax.random.normal(ks[6], (C,), jnp.float32),
        "bn2_b": 0.1 * jax.random.normal(ks[7], (C,), jnp.float32),
    }
    x = jax.random.normal(ks[8], (N, C, H, W), jnp.float32)

    # Weight packing happens once, outside the jitted forward (perf review).
    packed = pack_params(params, H=H, W=W, C=C)

    out = jax.block_until_ready(residual_block(x, packed))
    ref = jax.block_until_ready(reference_forward(x, params))

    assert out.shape == (N, C, H, W)
    err = jnp.abs(out - ref)
    # MXU operands are bf16 (f32 accumulation), so tolerance is looser than a
    # pure-f32 comparison.
    assert jnp.allclose(out, ref, atol=5e-2, rtol=5e-2), \
        f"max abs err {jnp.max(err)}"
    assert float(jnp.mean(err)) < 1e-2, f"mean abs err {jnp.mean(err)}"
    print("KERNEL_OK")
</pallas_src>

<mosaic_0001>
module attributes {stable_mosaic.version = 11 : i64} {
  func.func @_residual_block_kernel(%arg0: memref<16x128xf32, #tpu.memory_space<vmem>>, %arg1: memref<384x128xbf16, #tpu.memory_space<vmem>>, %arg2: memref<1x128xf32, #tpu.memory_space<vmem>>, %arg3: memref<1x128xf32, #tpu.memory_space<vmem>>, %arg4: memref<384x128xbf16, #tpu.memory_space<vmem>>, %arg5: memref<1x128xf32, #tpu.memory_space<vmem>>, %arg6: memref<1x128xf32, #tpu.memory_space<vmem>>, %arg7: memref<16x128xf32, #tpu.memory_space<vmem>>) attributes {dimension_semantics = [], scalar_prefetch = 0 : i64, scratch_operands = 0 : i64, tpu.core_type = #tpu.core_type<tc>} {
    %0 = tpu.iota {dimensions = array<i32: 0>} : vector<16x128xi32>
    %c8_i32 = arith.constant 8 : i32
    %c0_i32 = arith.constant 0 : i32
    %1 = arith.cmpi eq, %c8_i32, %c0_i32 : i32
    %c1_i32 = arith.constant 1 : i32
    %2 = arith.select %1, %c1_i32, %c8_i32 : i32
    %3 = vector.broadcast %2 : i32 to vector<16x128xi32>
    %4 = arith.remsi %0, %3 : vector<16x128xi32>
    %c0_i32_0 = arith.constant 0 : i32
    %5 = vector.broadcast %c0_i32_0 : i32 to vector<16x128xi32>
    %6 = arith.cmpi ne, %4, %5 : vector<16x128xi32>
    %c0_i32_1 = arith.constant 0 : i32
    %7 = vector.broadcast %c0_i32_1 : i32 to vector<16x128xi32>
    %8 = arith.cmpi slt, %4, %7 : vector<16x128xi32>
    %c0_i32_2 = arith.constant 0 : i32
    %9 = arith.cmpi slt, %2, %c0_i32_2 : i32
    %10 = vector.broadcast %9 : i1 to vector<16x128xi1>
    %11 = vector.broadcast %10 : vector<16x128xi1> to vector<16x128xi1>
    %12 = arith.xori %8, %11 : vector<16x128xi1>
    %13 = arith.andi %12, %6 : vector<16x128xi1>
    %14 = vector.broadcast %2 : i32 to vector<16x128xi32>
    %15 = arith.addi %4, %14 : vector<16x128xi32>
    %16 = arith.select %13, %15, %4 : vector<16x128xi1>, vector<16x128xi32>
    %c0_i32_3 = arith.constant 0 : i32
    %17 = vector.broadcast %c0_i32_3 : i32 to vector<16x128xi32>
    %18 = arith.cmpi eq, %16, %17 : vector<16x128xi32>
    %c7_i32 = arith.constant 7 : i32
    %19 = vector.broadcast %c7_i32 : i32 to vector<16x128xi32>
    %20 = arith.cmpi eq, %16, %19 : vector<16x128xi32>
    %c0 = arith.constant 0 : index
    %c0_4 = arith.constant 0 : index
    %21 = vector.load %arg0[%c0, %c0_4] : memref<16x128xf32, #tpu.memory_space<vmem>>, vector<16x128xf32>
    %c0_5 = arith.constant 0 : index
    %c0_6 = arith.constant 0 : index
    %22 = vector.load %arg1[%c0_5, %c0_6] : memref<384x128xbf16, #tpu.memory_space<vmem>>, vector<384x128xbf16>
    %c1_i32_7 = arith.constant 1 : i32
    %23 = tpu.dynamic_rotate %21 by %c1_i32_7 dim 0 : vector<16x128xf32>, i32 -> vector<16x128xf32>
    %cst = arith.constant 0.000000e+00 : f32
    %24 = vector.broadcast %cst : f32 to vector<16x128xf32>
    %25 = arith.select %18, %24, %23 : vector<16x128xi1>, vector<16x128xf32>
    %c15_i32 = arith.constant 15 : i32
    %26 = tpu.dynamic_rotate %21 by %c15_i32 dim 0 : vector<16x128xf32>, i32 -> vector<16x128xf32>
    %cst_8 = arith.constant 0.000000e+00 : f32
    %27 = vector.broadcast %cst_8 : f32 to vector<16x128xf32>
    %28 = arith.select %20, %27, %26 : vector<16x128xi1>, vector<16x128xf32>
    %29 = tpu.concatenate %25, %21, %28 in 1 : vector<16x128xf32>, vector<16x128xf32>, vector<16x128xf32> -> vector<16x384xf32>
    %30 = arith.truncf %29 : vector<16x384xf32> to vector<16x384xbf16>
    %cst_9 = arith.constant dense<0.000000e+00> : vector<16x128xf32>
    %31 = tpu.matmul %30, %22, %cst_9 {dimension_numbers = #tpu.dot_dimension_numbers<[1], [0], [0], [1], [0, 0, 1, 1], [], []>} : vector<16x384xbf16>, vector<384x128xbf16>, vector<16x128xf32> -> vector<16x128xf32>
    %cst_10 = arith.constant dense<0.000000e+00> : vector<128xf32>
    %32 = vector.multi_reduction <add>, %31, %cst_10 [0] : vector<16x128xf32> to vector<128xf32>
    %33 = vector.shape_cast %32 : vector<128xf32> to vector<1x128xf32>
    %c4_i32 = arith.constant 4 : i32
    %34 = tpu.dynamic_rotate %33 by %c4_i32 dim 1 : vector<1x128xf32>, i32 -> vector<1x128xf32>
    %35 = arith.addf %33, %34 : vector<1x128xf32>
    %c8_i32_11 = arith.constant 8 : i32
    %36 = tpu.dynamic_rotate %35 by %c8_i32_11 dim 1 : vector<1x128xf32>, i32 -> vector<1x128xf32>
    %37 = arith.addf %35, %36 : vector<1x128xf32>
    %c16_i32 = arith.constant 16 : i32
    %38 = tpu.dynamic_rotate %37 by %c16_i32 dim 1 : vector<1x128xf32>, i32 -> vector<1x128xf32>
    %39 = arith.addf %37, %38 : vector<1x128xf32>
    %c32_i32 = arith.constant 32 : i32
    %40 = tpu.dynamic_rotate %39 by %c32_i32 dim 1 : vector<1x128xf32>, i32 -> vector<1x128xf32>
    %41 = arith.addf %39, %40 : vector<1x128xf32>
    %c64_i32 = arith.constant 64 : i32
    %42 = tpu.dynamic_rotate %41 by %c64_i32 dim 1 : vector<1x128xf32>, i32 -> vector<1x128xf32>
    %43 = arith.addf %41, %42 : vector<1x128xf32>
    %cst_12 = arith.constant 0.001953125 : f32
    %44 = vector.broadcast %cst_12 : f32 to vector<1x128xf32>
    %45 = arith.mulf %43, %44 : vector<1x128xf32>
    %46 = vector.broadcast %45 : vector<1x128xf32> to vector<16x128xf32>
    %47 = arith.subf %31, %46 : vector<16x128xf32>
    %48 = arith.mulf %47, %47 : vector<16x128xf32>
    %cst_13 = arith.constant dense<0.000000e+00> : vector<128xf32>
    %49 = vector.multi_reduction <add>, %48, %cst_13 [0] : vector<16x128xf32> to vector<128xf32>
    %50 = vector.shape_cast %49 : vector<128xf32> to vector<1x128xf32>
    %c4_i32_14 = arith.constant 4 : i32
    %51 = tpu.dynamic_rotate %50 by %c4_i32_14 dim 1 : vector<1x128xf32>, i32 -> vector<1x128xf32>
    %52 = arith.addf %50, %51 : vector<1x128xf32>
    %c8_i32_15 = arith.constant 8 : i32
    %53 = tpu.dynamic_rotate %52 by %c8_i32_15 dim 1 : vector<1x128xf32>, i32 -> vector<1x128xf32>
    %54 = arith.addf %52, %53 : vector<1x128xf32>
    %c16_i32_16 = arith.constant 16 : i32
    %55 = tpu.dynamic_rotate %54 by %c16_i32_16 dim 1 : vector<1x128xf32>, i32 -> vector<1x128xf32>
    %56 = arith.addf %54, %55 : vector<1x128xf32>
    %c32_i32_17 = arith.constant 32 : i32
    %57 = tpu.dynamic_rotate %56 by %c32_i32_17 dim 1 : vector<1x128xf32>, i32 -> vector<1x128xf32>
    %58 = arith.addf %56, %57 : vector<1x128xf32>
    %c64_i32_18 = arith.constant 64 : i32
    %59 = tpu.dynamic_rotate %58 by %c64_i32_18 dim 1 : vector<1x128xf32>, i32 -> vector<1x128xf32>
    %60 = arith.addf %58, %59 : vector<1x128xf32>
    %cst_19 = arith.constant 0.001953125 : f32
    %61 = vector.broadcast %cst_19 : f32 to vector<1x128xf32>
    %62 = arith.mulf %60, %61 : vector<1x128xf32>
    %c0_20 = arith.constant 0 : index
    %c0_21 = arith.constant 0 : index
    %63 = vector.load %arg2[%c0_20, %c0_21] : memref<1x128xf32, #tpu.memory_space<vmem>>, vector<1x128xf32>
    %cst_22 = arith.constant 9.99999974E-6 : f32
    %64 = vector.broadcast %cst_22 : f32 to vector<1x128xf32>
    %65 = arith.addf %62, %64 : vector<1x128xf32>
    %66 = math.rsqrt %65 : vector<1x128xf32>
    %67 = arith.mulf %63, %66 : vector<1x128xf32>
    %c0_23 = arith.constant 0 : index
    %c0_24 = arith.constant 0 : index
    %68 = vector.load %arg3[%c0_23, %c0_24] : memref<1x128xf32, #tpu.memory_space<vmem>>, vector<1x128xf32>
    %69 = arith.mulf %45, %67 : vector<1x128xf32>
    %70 = arith.subf %68, %69 : vector<1x128xf32>
    %71 = vector.broadcast %67 : vector<1x128xf32> to vector<16x128xf32>
    %72 = arith.mulf %31, %71 : vector<16x128xf32>
    %73 = vector.broadcast %70 : vector<1x128xf32> to vector<16x128xf32>
    %74 = arith.addf %72, %73 : vector<16x128xf32>
    %cst_25 = arith.constant 0.000000e+00 : f32
    %75 = vector.broadcast %cst_25 : f32 to vector<16x128xf32>
    %76 = arith.maximumf %74, %75 : vector<16x128xf32>
    %c0_26 = arith.constant 0 : index
    %c0_27 = arith.constant 0 : index
    %77 = vector.load %arg4[%c0_26, %c0_27] : memref<384x128xbf16, #tpu.memory_space<vmem>>, vector<384x128xbf16>
    %c1_i32_28 = arith.constant 1 : i32
    %78 = tpu.dynamic_rotate %76 by %c1_i32_28 dim 0 : vector<16x128xf32>, i32 -> vector<16x128xf32>
    %cst_29 = arith.constant 0.000000e+00 : f32
    %79 = vector.broadcast %cst_29 : f32 to vector<16x128xf32>
    %80 = arith.select %18, %79, %78 : vector<16x128xi1>, vector<16x128xf32>
    %c15_i32_30 = arith.constant 15 : i32
    %81 = tpu.dynamic_rotate %76 by %c15_i32_30 dim 0 : vector<16x128xf32>, i32 -> vector<16x128xf32>
    %cst_31 = arith.constant 0.000000e+00 : f32
    %82 = vector.broadcast %cst_31 : f32 to vector<16x128xf32>
    %83 = arith.select %20, %82, %81 : vector<16x128xi1>, vector<16x128xf32>
    %84 = tpu.concatenate %80, %76, %83 in 1 : vector<16x128xf32>, vector<16x128xf32>, vector<16x128xf32> -> vector<16x384xf32>
    %85 = arith.truncf %84 : vector<16x384xf32> to vector<16x384xbf16>
    %cst_32 = arith.constant dense<0.000000e+00> : vector<16x128xf32>
    %86 = tpu.matmul %85, %77, %cst_32 {dimension_numbers = #tpu.dot_dimension_numbers<[1], [0], [0], [1], [0, 0, 1, 1], [], []>} : vector<16x384xbf16>, vector<384x128xbf16>, vector<16x128xf32> -> vector<16x128xf32>
    %cst_33 = arith.constant dense<0.000000e+00> : vector<128xf32>
    %87 = vector.multi_reduction <add>, %86, %cst_33 [0] : vector<16x128xf32> to vector<128xf32>
    %88 = vector.shape_cast %87 : vector<128xf32> to vector<1x128xf32>
    %c4_i32_34 = arith.constant 4 : i32
    %89 = tpu.dynamic_rotate %88 by %c4_i32_34 dim 1 : vector<1x128xf32>, i32 -> vector<1x128xf32>
    %90 = arith.addf %88, %89 : vector<1x128xf32>
    %c8_i32_35 = arith.constant 8 : i32
    %91 = tpu.dynamic_rotate %90 by %c8_i32_35 dim 1 : vector<1x128xf32>, i32 -> vector<1x128xf32>
    %92 = arith.addf %90, %91 : vector<1x128xf32>
    %c16_i32_36 = arith.constant 16 : i32
    %93 = tpu.dynamic_rotate %92 by %c16_i32_36 dim 1 : vector<1x128xf32>, i32 -> vector<1x128xf32>
    %94 = arith.addf %92, %93 : vector<1x128xf32>
    %c32_i32_37 = arith.constant 32 : i32
    %95 = tpu.dynamic_rotate %94 by %c32_i32_37 dim 1 : vector<1x128xf32>, i32 -> vector<1x128xf32>
    %96 = arith.addf %94, %95 : vector<1x128xf32>
    %c64_i32_38 = arith.constant 64 : i32
    %97 = tpu.dynamic_rotate %96 by %c64_i32_38 dim 1 : vector<1x128xf32>, i32 -> vector<1x128xf32>
    %98 = arith.addf %96, %97 : vector<1x128xf32>
    %cst_39 = arith.constant 0.001953125 : f32
    %99 = vector.broadcast %cst_39 : f32 to vector<1x128xf32>
    %100 = arith.mulf %98, %99 : vector<1x128xf32>
    %101 = vector.broadcast %100 : vector<1x128xf32> to vector<16x128xf32>
    %102 = arith.subf %86, %101 : vector<16x128xf32>
    %103 = arith.mulf %102, %102 : vector<16x128xf32>
    %cst_40 = arith.constant dense<0.000000e+00> : vector<128xf32>
    %104 = vector.multi_reduction <add>, %103, %cst_40 [0] : vector<16x128xf32> to vector<128xf32>
    %105 = vector.shape_cast %104 : vector<128xf32> to vector<1x128xf32>
    %c4_i32_41 = arith.constant 4 : i32
    %106 = tpu.dynamic_rotate %105 by %c4_i32_41 dim 1 : vector<1x128xf32>, i32 -> vector<1x128xf32>
    %107 = arith.addf %105, %106 : vector<1x128xf32>
    %c8_i32_42 = arith.constant 8 : i32
    %108 = tpu.dynamic_rotate %107 by %c8_i32_42 dim 1 : vector<1x128xf32>, i32 -> vector<1x128xf32>
    %109 = arith.addf %107, %108 : vector<1x128xf32>
    %c16_i32_43 = arith.constant 16 : i32
    %110 = tpu.dynamic_rotate %109 by %c16_i32_43 dim 1 : vector<1x128xf32>, i32 -> vector<1x128xf32>
    %111 = arith.addf %109, %110 : vector<1x128xf32>
    %c32_i32_44 = arith.constant 32 : i32
    %112 = tpu.dynamic_rotate %111 by %c32_i32_44 dim 1 : vector<1x128xf32>, i32 -> vector<1x128xf32>
    %113 = arith.addf %111, %112 : vector<1x128xf32>
    %c64_i32_45 = arith.constant 64 : i32
    %114 = tpu.dynamic_rotate %113 by %c64_i32_45 dim 1 : vector<1x128xf32>, i32 -> vector<1x128xf32>
    %115 = arith.addf %113, %114 : vector<1x128xf32>
    %cst_46 = arith.constant 0.001953125 : f32
    %116 = vector.broadcast %cst_46 : f32 to vector<1x128xf32>
    %117 = arith.mulf %115, %116 : vector<1x128xf32>
    %c0_47 = arith.constant 0 : index
    %c0_48 = arith.constant 0 : index
    %118 = vector.load %arg5[%c0_47, %c0_48] : memref<1x128xf32, #tpu.memory_space<vmem>>, vector<1x128xf32>
    %cst_49 = arith.constant 9.99999974E-6 : f32
    %119 = vector.broadcast %cst_49 : f32 to vector<1x128xf32>
    %120 = arith.addf %117, %119 : vector<1x128xf32>
    %121 = math.rsqrt %120 : vector<1x128xf32>
    %122 = arith.mulf %118, %121 : vector<1x128xf32>
    %c0_50 = arith.constant 0 : index
    %c0_51 = arith.constant 0 : index
    %123 = vector.load %arg6[%c0_50, %c0_51] : memref<1x128xf32, #tpu.memory_space<vmem>>, vector<1x128xf32>
    %124 = arith.mulf %100, %122 : vector<1x128xf32>
    %125 = arith.subf %123, %124 : vector<1x128xf32>
    %126 = vector.broadcast %122 : vector<1x128xf32> to vector<16x128xf32>
    %127 = arith.mulf %86, %126 : vector<16x128xf32>
    %128 = vector.broadcast %125 : vector<1x128xf32> to vector<16x128xf32>
    %129 = arith.addf %127, %128 : vector<16x128xf32>
    %130 = arith.addf %129, %21 : vector<16x128xf32>
    %cst_52 = arith.constant 0.000000e+00 : f32
    %131 = vector.broadcast %cst_52 : f32 to vector<16x128xf32>
    %132 = arith.maximumf %130, %131 : vector<16x128xf32>
    %c0_53 = arith.constant 0 : index
    %c0_54 = arith.constant 0 : index
    %133 = vector.load %arg7[%c0_53, %c0_54] : memref<16x128xf32, #tpu.memory_space<vmem>>, vector<16x128xf32>
    tpu.vector_store %arg7[%c0_53, %c0_54], %132 {strides = array<i32>} : memref<16x128xf32, #tpu.memory_space<vmem>>, vector<16x128xf32>,
    return
  }
}

</mosaic_0001>

<llo_original>
// kernel: residual_block.1
$region0: #{residual_block.1}
  #allocation0 [shape = 'u32[]', space=smem, size = 0x4, offset = 0x4, fixed_abs, tag = 'smem constant byte address 0x4 - core index']
  #allocation1 [shape = 'u32[72,128]{1,0:T(1,128)}', space=vmem, size = 0x9000, scoped, tag = 'internal scratch']
  %s0 = inlined_call_operand.vmem [shape: f32[16,128], index: 0, kind: input, shape index: {}]
  %s1 = inlined_call_operand.vmem [shape: bf16[384,128], index: 1, kind: input, shape index: {}]
  %s2 = inlined_call_operand.vmem [shape: f32[1,128], index: 2, kind: input, shape index: {}]
  %s3 = inlined_call_operand.vmem [shape: f32[1,128], index: 3, kind: input, shape index: {}]
  %s4 = inlined_call_operand.vmem [shape: bf16[384,128], index: 4, kind: input, shape index: {}]
  %s5 = inlined_call_operand.vmem [shape: f32[1,128], index: 5, kind: input, shape index: {}]
  %s6 = inlined_call_operand.vmem [shape: f32[1,128], index: 6, kind: input, shape index: {}]
  %s7 = inlined_call_operand.vmem [shape: f32[16,128], index: 7, kind: output, shape index: {}]
  %s8 = sld [smem:[#allocation0]]
  $region38: #{residual_block.1} parent=0
    _
  %s10 = ssub.s32 1, %s8
  %s11 = scalar_select 0, %s10, %s8
  // Predicated region
  $region2: #{residual_block.1} parent=0 // pred_check
    _
  $region3: #{residual_block.1} parent=0 // pred_check_branch
    %13 = sbr.rel (0) target = $region5
  $region4: #{residual_block.1} parent=0 // pred_region
    _
  $region5: #{residual_block.1} parent=0 // pred_fallthru
    _
  // Predicated region
  $region6: #{residual_block.1} parent=0 // pred_check
    _
  $region7: #{residual_block.1} parent=0 // pred_check_branch
    %15 = sbr.rel (0) target = $region9
  $region8: #{residual_block.1} parent=0 // pred_region
    _
  $region9: #{residual_block.1} parent=0 // pred_fallthru
    _
  // Predicated region
  $region10: #{residual_block.1} parent=0 // pred_check
    _
  $region11: #{residual_block.1} parent=0 // pred_check_branch
    %17 = sbr.rel (0) target = $region13
  $region12: #{residual_block.1} parent=0 // pred_region
    _
  $region13: #{residual_block.1} parent=0 // pred_fallthru
    _
  // Predicated region
  $region14: #{residual_block.1} parent=0 // pred_check
    _
  $region15: #{residual_block.1} parent=0 // pred_check_branch
    %19 = sbr.rel (0) target = $region17
  $region16: #{residual_block.1} parent=0 // pred_region
    _
  $region17: #{residual_block.1} parent=0 // pred_fallthru
    _
  // Predicated region
  $region18: #{residual_block.1} parent=0 // pred_check
    _
  $region19: #{residual_block.1} parent=0 // pred_check_branch
    %21 = sbr.rel (0) target = $region21
  $region20: #{residual_block.1} parent=0 // pred_region
    _
  $region21: #{residual_block.1} parent=0 // pred_fallthru
    _
  // Predicated region
  $region22: #{residual_block.1} parent=0 // pred_check
    _
  $region23: #{residual_block.1} parent=0 // pred_check_branch
    %23 = sbr.rel (0) target = $region25
  $region24: #{residual_block.1} parent=0 // pred_region
    _
  $region25: #{residual_block.1} parent=0 // pred_fallthru
    _
  // Predicated region
  $region26: #{residual_block.1} parent=0 // pred_check
    _
  $region27: #{residual_block.1} parent=0 // pred_check_branch
    %25 = sbr.rel (0) target = $region29
  $region28: #{residual_block.1} parent=0 // pred_region
    _
  $region29: #{residual_block.1} parent=0 // pred_fallthru
    _
  %v26 = vlaneseq
  %v27 = vshrl.u32 %v26, 7
  %v28 = vadd.s32 %v27, 8
  %vm29 = vcmp.lt.s32.totalorder %v27, 0
  %v30 = vsub.s32 0, %v27
  %v31 = vsel %vm29, %v30, %v27
  %v32 = vshrl.u32 %v31, 3
  %v33 = vand.u32 %v31, 7
  %v34 = vsub.s32 0, %v33
  %v35 = vsel %vm29, %v34, %v33
  %vm36 = vcmp.lt.s32.totalorder %v28, 0
  %v37 = vsub.s32 0, %v28
  %v38 = vsel %vm36, %v37, %v28
  %v39 = vshrl.u32 %v38, 3
  %v40 = vand.u32 %v38, 7
  %v41 = vsub.s32 0, %v40
  %v42 = vsel %vm36, %v41, %v40
  %vm43 = vcmp.ne.s32.totalorder %v35, 0
  %vm44 = vcmp.ne.s32.totalorder %v42, 0
  %vm45 = vcmp.lt.s32.totalorder %v35, 0
  %vm46 = vcmp.lt.s32.totalorder %v42, 0
  %vm47 = vmand %vm45, %vm43
  %vm48 = vmand %vm46, %vm44
  %v49 = vadd.s32 %v35, 8
  %v50 = vadd.s32 %v42, 8
  %v51 = vsel %vm47, %v49, %v35
  %v52 = vsel %vm48, %v50, %v42
  %vm53 = vcmp.eq.s32.totalorder %v51, 0
  %vm54 = vcmp.eq.s32.totalorder %v52, 0
  %vm55 = vcmp.eq.s32.totalorder %v51, 7
  %vm56 = vcmp.eq.s32.totalorder %v52, 7
  %v57 = vld [vmem:[%s0] sm:$0xff]
  %v58 = vld [vmem:[%s0 + $0x8] sm:$0xff]
  %v59 = vld [vmem:[%s1] sm:$0xf]
  %v60 = vld [vmem:[%s1 + $0x4] sm:$0xf]
  %v61 = vld [vmem:[%s1 + $0x8] sm:$0xf]
  %v62 = vld [vmem:[%s1 + $0xc] sm:$0xf]
  %v63 = vld [vmem:[%s1 + $0x10] sm:$0xf]
  %v64 = vld [vmem:[%s1 + $0x14] sm:$0xf]
  %v65 = vld [vmem:[%s1 + $0x18] sm:$0xf]
  %v66 = vld [vmem:[%s1 + $0x1c] sm:$0xf]
  %v67 = vld [vmem:[%s1 + $0x20] sm:$0xf]
  %v68 = vld [vmem:[%s1 + $0x24] sm:$0xf]
  %v69 = vld [vmem:[%s1 + $0x28] sm:$0xf]
  %v70 = vld [vmem:[%s1 + $0x2c] sm:$0xf]
  %v71 = vld [vmem:[%s1 + $0x30] sm:$0xf]
  %v72 = vld [vmem:[%s1 + $0x34] sm:$0xf]
  %v73 = vld [vmem:[%s1 + $0x38] sm:$0xf]
  %v74 = vld [vmem:[%s1 + $0x3c] sm:$0xf]
  %v75 = vld [vmem:[%s1 + $0x40] sm:$0xf]
  %v76 = vld [vmem:[%s1 + $0x44] sm:$0xf]
  %v77 = vld [vmem:[%s1 + $0x48] sm:$0xf]
  %v78 = vld [vmem:[%s1 + $0x4c] sm:$0xf]
  %v79 = vld [vmem:[%s1 + $0x50] sm:$0xf]
  %v80 = vld [vmem:[%s1 + $0x54] sm:$0xf]
  %v81 = vld [vmem:[%s1 + $0x58] sm:$0xf]
  %v82 = vld [vmem:[%s1 + $0x5c] sm:$0xf]
  %v83 = vld [vmem:[%s1 + $0x60] sm:$0xf]
  %v84 = vld [vmem:[%s1 + $0x64] sm:$0xf]
  %v85 = vld [vmem:[%s1 + $0x68] sm:$0xf]
  %v86 = vld [vmem:[%s1 + $0x6c] sm:$0xf]
  %v87 = vld [vmem:[%s1 + $0x70] sm:$0xf]
  %v88 = vld [vmem:[%s1 + $0x74] sm:$0xf]
  %v89 = vld [vmem:[%s1 + $0x78] sm:$0xf]
  %v90 = vld [vmem:[%s1 + $0x7c] sm:$0xf]
  %v91 = vld [vmem:[%s1 + $0x80] sm:$0xf]
  %v92 = vld [vmem:[%s1 + $0x84] sm:$0xf]
  %v93 = vld [vmem:[%s1 + $0x88] sm:$0xf]
  %v94 = vld [vmem:[%s1 + $0x8c] sm:$0xf]
  %v95 = vld [vmem:[%s1 + $0x90] sm:$0xf]
  %v96 = vld [vmem:[%s1 + $0x94] sm:$0xf]
  %v97 = vld [vmem:[%s1 + $0x98] sm:$0xf]
  %v98 = vld [vmem:[%s1 + $0x9c] sm:$0xf]
  %v99 = vld [vmem:[%s1 + $0xa0] sm:$0xf]
  %v100 = vld [vmem:[%s1 + $0xa4] sm:$0xf]
  %v101 = vld [vmem:[%s1 + $0xa8] sm:$0xf]
  %v102 = vld [vmem:[%s1 + $0xac] sm:$0xf]
  %v103 = vld [vmem:[%s1 + $0xb0] sm:$0xf]
  %v104 = vld [vmem:[%s1 + $0xb4] sm:$0xf]
  %v105 = vld [vmem:[%s1 + $0xb8] sm:$0xf]
  %v106 = vld [vmem:[%s1 + $0xbc] sm:$0xf]
  %v107 = vrot.slane %v57, 7
  %v108 = vrot.slane %v58, 7
  %vm109 = vcmp.lt.s32.totalorder %v27, 1
  %v110 = vsel %vm109, %v107, %v108
  %v111 = vsel %vm109, %v108, %v107
  %v112 = vsel %vm53, 0.0, %v111
  %v113 = vsel %vm54, 0.0, %v110
  %v114 = vrot.slane %v57, 1
  %v115 = vrot.slane %v58, 1
  %vm116 = vcmp.lt.s32.totalorder %v27, 7
  %v117 = vsel %vm116, %v114, %v115
  %v118 = vsel %vm116, %v115, %v114
  %v119 = vsel %vm55, 0.0, %v117
  %v120 = vsel %vm56, 0.0, %v118
  %v121 = vpack.c.bf16 %v113, %v112
  %v122 = vpack.c.bf16 %v58, %v57
  %v123 = vpack.c.bf16 %v120, %v119
  %v172 = vunpack.c.l.b16 %v59
  %v173 = vunpack.c.l.b16 %v60
  %v174 = vunpack.c.l.b16 %v61
  %v175 = vunpack.c.l.b16 %v62
  %v176 = vunpack.c.l.b16 %v63
  %v177 = vunpack.c.l.b16 %v64
  %v178 = vunpack.c.l.b16 %v65
  %v179 = vunpack.c.l.b16 %v66
  %v180 = vunpack.c.l.b16 %v67
  %v181 = vunpack.c.l.b16 %v68
  %v182 = vunpack.c.l.b16 %v69
  %v183 = vunpack.c.l.b16 %v70
  %v184 = vunpack.c.l.b16 %v71
  %v185 = vunpack.c.l.b16 %v72
  %v186 = vunpack.c.l.b16 %v73
  %v187 = vunpack.c.l.b16 %v74
  %v188 = vunpack.c.l.b16 %v75
  %v189 = vunpack.c.l.b16 %v76
  %v190 = vunpack.c.l.b16 %v77
  %v191 = vunpack.c.l.b16 %v78
  %v192 = vunpack.c.l.b16 %v79
  %v193 = vunpack.c.l.b16 %v80
  %v194 = vunpack.c.l.b16 %v81
  %v195 = vunpack.c.l.b16 %v82
  %v196 = vunpack.c.l.b16 %v83
  %v197 = vunpack.c.l.b16 %v84
  %v198 = vunpack.c.l.b16 %v85
  %v199 = vunpack.c.l.b16 %v86
  %v200 = vunpack.c.l.b16 %v87
  %v201 = vunpack.c.l.b16 %v88
  %v202 = vunpack.c.l.b16 %v89
  %v203 = vunpack.c.l.b16 %v90
  %v204 = vunpack.c.l.b16 %v91
  %v205 = vunpack.c.l.b16 %v92
  %v206 = vunpack.c.l.b16 %v93
  %v207 = vunpack.c.l.b16 %v94
  %v208 = vunpack.c.l.b16 %v95
  %v209 = vunpack.c.l.b16 %v96
  %v210 = vunpack.c.l.b16 %v97
  %v211 = vunpack.c.l.b16 %v98
  %v212 = vunpack.c.l.b16 %v99
  %v213 = vunpack.c.l.b16 %v100
  %v214 = vunpack.c.l.b16 %v101
  %v215 = vunpack.c.l.b16 %v102
  %v216 = vunpack.c.l.b16 %v103
  %v217 = vunpack.c.l.b16 %v104
  %v218 = vunpack.c.l.b16 %v105
  %v219 = vunpack.c.l.b16 %v106
  %v220 = vpack.c.b16 %v173, %v172
  %v221 = vpack.c.b16 %v175, %v174
  %v222 = vpack.c.b16 %v177, %v176
  %v223 = vpack.c.b16 %v179, %v178
  %v224 = vpack.c.b16 %v181, %v180
  %v225 = vpack.c.b16 %v183, %v182
  %v226 = vpack.c.b16 %v185, %v184
  %v227 = vpack.c.b16 %v187, %v186
  %v228 = vpack.c.b16 %v189, %v188
  %v229 = vpack.c.b16 %v191, %v190
  %v230 = vpack.c.b16 %v193, %v192
  %v231 = vpack.c.b16 %v195, %v194
  %v232 = vpack.c.b16 %v197, %v196
  %v233 = vpack.c.b16 %v199, %v198
  %v234 = vpack.c.b16 %v201, %v200
  %v235 = vpack.c.b16 %v203, %v202
  %v236 = vpack.c.b16 %v205, %v204
  %v237 = vpack.c.b16 %v207, %v206
  %v238 = vpack.c.b16 %v209, %v208
  %v239 = vpack.c.b16 %v211, %v210
  %v240 = vpack.c.b16 %v213, %v212
  %v241 = vpack.c.b16 %v215, %v214
  %v242 = vpack.c.b16 %v217, %v216
  %v243 = vpack.c.b16 %v219, %v218
  %268 = vmatpush.bf16.msra.mxu0 %v227
  %269 = vmatpush.bf16.msra.mxu0 %v226
  %270 = vmatpush.bf16.msra.mxu0 %v225
  %271 = vmatpush.bf16.msra.mxu0 %v224
  %272 = vmatpush.bf16.msra.mxu0 %v223
  %273 = vmatpush.bf16.msra.mxu0 %v222
  %274 = vmatpush.bf16.msra.mxu0 %v221
  %275 = vmatpush.bf16.msra.mxu0 %v220
  %276 = vmatmul.bf16.gmra.mxu0 %v121
  %v277 = vpop.f32.mrf.mxu0
  %v278 = vadd.f32 0.0, %v277
  %v279 = vpop.f32.mrf.mxu0
  %v280 = vadd.f32 0.0, %v279
  %281 = vdwg.mxu0
  %282 = vmatpush.bf16.msra.mxu0 %v235
  %283 = vmatpush.bf16.msra.mxu0 %v234
  %284 = vmatpush.bf16.msra.mxu0 %v233
  %285 = vmatpush.bf16.msra.mxu0 %v232
  %286 = vmatpush.bf16.msra.mxu0 %v231
  %287 = vmatpush.bf16.msra.mxu0 %v230
  %288 = vmatpush.bf16.msra.mxu0 %v229
  %289 = vmatpush.bf16.msra.mxu0 %v228
  %290 = vmatmul.bf16.gmra.mxu0 %v122
  %v291 = vpop.f32.mrf.mxu0
  %v292 = vadd.f32 %v278, %v291
  %v293 = vpop.f32.mrf.mxu0
  %v294 = vadd.f32 %v280, %v293
  %295 = vdwg.mxu0
  %296 = vmatpush.bf16.msra.mxu0 %v243
  %297 = vmatpush.bf16.msra.mxu0 %v242
  %298 = vmatpush.bf16.msra.mxu0 %v241
  %299 = vmatpush.bf16.msra.mxu0 %v240
  %300 = vmatpush.bf16.msra.mxu0 %v239
  %301 = vmatpush.bf16.msra.mxu0 %v238
  %302 = vmatpush.bf16.msra.mxu0 %v237
  %303 = vmatpush.bf16.msra.mxu0 %v236
  %304 = vmatmul.bf16.gmra.mxu0 %v123
  %v305 = vpop.f32.mrf.mxu0
  %v306 = vadd.f32 %v292, %v305
  %v307 = vpop.f32.mrf.mxu0
  %v308 = vadd.f32 %v294, %v307
  %309 = vdwg.mxu0
  %v310 = vadd.f32 %v306, %v308
  %v311 = vrot.slane %v310, 4
  %v312 = vadd.f32 %v310, %v311
  %v313 = vrot.slane %v312, 2
  %v314 = vadd.f32 %v312, %v313
  %v315 = vrot.slane %v314, 1
  %v316 = vadd.f32 %v314, %v315
  %317 = vrot.lane.b32.xlu0 %v316, 4
  %v318 = vpop.permute.xlu0 %317
  %v319 = vadd.f32 %v316, %v318
  %320 = vrot.lane.b32.xlu0 %v319, 8
  %v321 = vpop.permute.xlu0 %320
  %v322 = vadd.f32 %v319, %v321
  %323 = vrot.lane.b32.xlu0 %v322, 16
  %v324 = vpop.permute.xlu0 %323
  %v325 = vadd.f32 %v322, %v324
  %326 = vrot.lane.b32.xlu0 %v325, 32
  %v327 = vpop.permute.xlu0 %326
  %v328 = vadd.f32 %v325, %v327
  %329 = vrot.lane.b32.xlu0 %v328, 64
  %v330 = vpop.permute.xlu0 %329
  %v331 = vadd.f32 %v328, %v330
  %v332 = vmul.f32 %v331, 0.001953125
  %v333 = vperm.slane %v332, 0
  %v334 = vsub.f32 %v306, %v333
  %v335 = vsub.f32 %v308, %v333
  %v336 = vmul.f32 %v334, %v334
  %v337 = vmul.f32 %v335, %v335
  %v338 = vadd.f32 %v336, %v337
  %v339 = vrot.slane %v338, 4
  %v340 = vadd.f32 %v338, %v339
  %v341 = vrot.slane %v340, 2
  %v342 = vadd.f32 %v340, %v341
  %v343 = vrot.slane %v342, 1
  %v344 = vadd.f32 %v342, %v343
  %345 = vrot.lane.b32.xlu0 %v344, 4
  %v346 = vpop.permute.xlu0 %345
  %v347 = vadd.f32 %v344, %v346
  %348 = vrot.lane.b32.xlu0 %v347, 8
  %v349 = vpop.permute.xlu0 %348
  %v350 = vadd.f32 %v347, %v349
  %351 = vrot.lane.b32.xlu0 %v350, 16
  %v352 = vpop.permute.xlu0 %351
  %v353 = vadd.f32 %v350, %v352
  %354 = vrot.lane.b32.xlu0 %v353, 32
  %v355 = vpop.permute.xlu0 %354
  %v356 = vadd.f32 %v353, %v355
  %357 = vrot.lane.b32.xlu0 %v356, 64
  %v358 = vpop.permute.xlu0 %357
  %v359 = vadd.f32 %v356, %v358
  %v360 = vmul.f32 %v359, 0.001953125
  %v361 = vld [vmem:[%s2] sm:$0x1]
  %v362 = vadd.f32 %v360, 1e-05
  %v363 = vrsqrt.pop %v362
  %v364 = vmul.f32 %v363, %v362
  %v365 = vmul.f32 %v364, %v363
  %v366 = vmul.f32 0.5, %v365
  %v367 = vsub.f32 1.5, %v366
  %v368 = vmul.f32 %v363, %v367
  %vm369 = vweird.f32 %v362
  %vm370 = vweird.f32 %v363
  %vm371 = vmor %vm369, %vm370
  %v372 = vsel %vm371, %v363, %v368
  %v373 = vmul.f32 %v361, %v372
  %v374 = vld [vmem:[%s3] sm:$0x1]
  %v375 = vmul.f32 %v332, %v373
  %v376 = vsub.f32 %v374, %v375
  %v378 = vperm.slane %v373, 0
  %v380 = vmul.f32 %v306, %v378
  %v381 = vmul.f32 %v308, %v378
  %v383 = vperm.slane %v376, 0
  %v385 = vadd.f32 %v380, %v383
  %v386 = vadd.f32 %v381, %v383
  %v387 = vmax.f32 %v385, 0.0
  %v388 = vmax.f32 %v386, 0.0
  %v389 = vld [vmem:[%s4] sm:$0xf]
  %v390 = vld [vmem:[%s4 + $0x4] sm:$0xf]
  %v391 = vld [vmem:[%s4 + $0x8] sm:$0xf]
  %v392 = vld [vmem:[%s4 + $0xc] sm:$0xf]
  %v393 = vld [vmem:[%s4 + $0x10] sm:$0xf]
  %v394 = vld [vmem:[%s4 + $0x14] sm:$0xf]
  %v395 = vld [vmem:[%s4 + $0x18] sm:$0xf]
  %v396 = vld [vmem:[%s4 + $0x1c] sm:$0xf]
  %v397 = vld [vmem:[%s4 + $0x20] sm:$0xf]
  %v398 = vld [vmem:[%s4 + $0x24] sm:$0xf]
  %v399 = vld [vmem:[%s4 + $0x28] sm:$0xf]
  %v400 = vld [vmem:[%s4 + $0x2c] sm:$0xf]
  %v401 = vld [vmem:[%s4 + $0x30] sm:$0xf]
  %v402 = vld [vmem:[%s4 + $0x34] sm:$0xf]
  %v403 = vld [vmem:[%s4 + $0x38] sm:$0xf]
  %v404 = vld [vmem:[%s4 + $0x3c] sm:$0xf]
  %v405 = vld [vmem:[%s4 + $0x40] sm:$0xf]
  %v406 = vld [vmem:[%s4 + $0x44] sm:$0xf]
  %v407 = vld [vmem:[%s4 + $0x48] sm:$0xf]
  %v408 = vld [vmem:[%s4 + $0x4c] sm:$0xf]
  %v409 = vld [vmem:[%s4 + $0x50] sm:$0xf]
  %v410 = vld [vmem:[%s4 + $0x54] sm:$0xf]
  %v411 = vld [vmem:[%s4 + $0x58] sm:$0xf]
  %v412 = vld [vmem:[%s4 + $0x5c] sm:$0xf]
  %v413 = vld [vmem:[%s4 + $0x60] sm:$0xf]
  %v414 = vld [vmem:[%s4 + $0x64] sm:$0xf]
  %v415 = vld [vmem:[%s4 + $0x68] sm:$0xf]
  %v416 = vld [vmem:[%s4 + $0x6c] sm:$0xf]
  %v417 = vld [vmem:[%s4 + $0x70] sm:$0xf]
  %v418 = vld [vmem:[%s4 + $0x74] sm:$0xf]
  %v419 = vld [vmem:[%s4 + $0x78] sm:$0xf]
  %v420 = vld [vmem:[%s4 + $0x7c] sm:$0xf]
  %v421 = vld [vmem:[%s4 + $0x80] sm:$0xf]
  %v422 = vld [vmem:[%s4 + $0x84] sm:$0xf]
  %v423 = vld [vmem:[%s4 + $0x88] sm:$0xf]
  %v424 = vld [vmem:[%s4 + $0x8c] sm:$0xf]
  %v425 = vld [vmem:[%s4 + $0x90] sm:$0xf]
  %v426 = vld [vmem:[%s4 + $0x94] sm:$0xf]
  %v427 = vld [vmem:[%s4 + $0x98] sm:$0xf]
  %v428 = vld [vmem:[%s4 + $0x9c] sm:$0xf]
  %v429 = vld [vmem:[%s4 + $0xa0] sm:$0xf]
  %v430 = vld [vmem:[%s4 + $0xa4] sm:$0xf]
  %v431 = vld [vmem:[%s4 + $0xa8] sm:$0xf]
  %v432 = vld [vmem:[%s4 + $0xac] sm:$0xf]
  %v433 = vld [vmem:[%s4 + $0xb0] sm:$0xf]
  %v434 = vld [vmem:[%s4 + $0xb4] sm:$0xf]
  %v435 = vld [vmem:[%s4 + $0xb8] sm:$0xf]
  %v436 = vld [vmem:[%s4 + $0xbc] sm:$0xf]
  %v437 = vrot.slane %v387, 7
  %v438 = vrot.slane %v388, 7
  %v439 = vsel %vm109, %v437, %v438
  %v440 = vsel %vm109, %v438, %v437
  %v441 = vsel %vm53, 0.0, %v440
  %v442 = vsel %vm54, 0.0, %v439
  %v443 = vrot.slane %v387, 1
  %v444 = vrot.slane %v388, 1
  %v445 = vsel %vm116, %v443, %v444
  %v446 = vsel %vm116, %v444, %v443
  %v447 = vsel %vm55, 0.0, %v445
  %v448 = vsel %vm56, 0.0, %v446
  %v449 = vpack.c.bf16 %v442, %v441
  %v450 = vpack.c.bf16 %v388, %v387
  %v451 = vpack.c.bf16 %v448, %v447
  %v500 = vunpack.c.l.b16 %v389
  %v501 = vunpack.c.l.b16 %v390
  %v502 = vunpack.c.l.b16 %v391
  %v503 = vunpack.c.l.b16 %v392
  %v504 = vunpack.c.l.b16 %v393
  %v505 = vunpack.c.l.b16 %v394
  %v506 = vunpack.c.l.b16 %v395
  %v507 = vunpack.c.l.b16 %v396
  %v508 = vunpack.c.l.b16 %v397
  %v509 = vunpack.c.l.b16 %v398
  %v510 = vunpack.c.l.b16 %v399
  %v511 = vunpack.c.l.b16 %v400
  %v512 = vunpack.c.l.b16 %v401
  %v513 = vunpack.c.l.b16 %v402
  %v514 = vunpack.c.l.b16 %v403
  %v515 = vunpack.c.l.b16 %v404
  %v516 = vunpack.c.l.b16 %v405
  %v517 = vunpack.c.l.b16 %v406
  %v518 = vunpack.c.l.b16 %v407
  %v519 = vunpack.c.l.b16 %v408
  %v520 = vunpack.c.l.b16 %v409
  %v521 = vunpack.c.l.b16 %v410
  %v522 = vunpack.c.l.b16 %v411
  %v523 = vunpack.c.l.b16 %v412
  %v524 = vunpack.c.l.b16 %v413
  %v525 = vunpack.c.l.b16 %v414
  %v526 = vunpack.c.l.b16 %v415
  %v527 = vunpack.c.l.b16 %v416
  %v528 = vunpack.c.l.b16 %v417
  %v529 = vunpack.c.l.b16 %v418
  %v530 = vunpack.c.l.b16 %v419
  %v531 = vunpack.c.l.b16 %v420
  %v532 = vunpack.c.l.b16 %v421
  %v533 = vunpack.c.l.b16 %v422
  %v534 = vunpack.c.l.b16 %v423
  %v535 = vunpack.c.l.b16 %v424
  %v536 = vunpack.c.l.b16 %v425
  %v537 = vunpack.c.l.b16 %v426
  %v538 = vunpack.c.l.b16 %v427
  %v539 = vunpack.c.l.b16 %v428
  %v540 = vunpack.c.l.b16 %v429
  %v541 = vunpack.c.l.b16 %v430
  %v542 = vunpack.c.l.b16 %v431
  %v543 = vunpack.c.l.b16 %v432
  %v544 = vunpack.c.l.b16 %v433
  %v545 = vunpack.c.l.b16 %v434
  %v546 = vunpack.c.l.b16 %v435
  %v547 = vunpack.c.l.b16 %v436
  %v548 = vpack.c.b16 %v501, %v500
  %v549 = vpack.c.b16 %v503, %v502
  %v550 = vpack.c.b16 %v505, %v504
  %v551 = vpack.c.b16 %v507, %v506
  %v552 = vpack.c.b16 %v509, %v508
  %v553 = vpack.c.b16 %v511, %v510
  %v554 = vpack.c.b16 %v513, %v512
  %v555 = vpack.c.b16 %v515, %v514
  %v556 = vpack.c.b16 %v517, %v516
  %v557 = vpack.c.b16 %v519, %v518
  %v558 = vpack.c.b16 %v521, %v520
  %v559 = vpack.c.b16 %v523, %v522
  %v560 = vpack.c.b16 %v525, %v524
  %v561 = vpack.c.b16 %v527, %v526
  %v562 = vpack.c.b16 %v529, %v528
  %v563 = vpack.c.b16 %v531, %v530
  %v564 = vpack.c.b16 %v533, %v532
  %v565 = vpack.c.b16 %v535, %v534
  %v566 = vpack.c.b16 %v537, %v536
  %v567 = vpack.c.b16 %v539, %v538
  %v568 = vpack.c.b16 %v541, %v540
  %v569 = vpack.c.b16 %v543, %v542
  %v570 = vpack.c.b16 %v545, %v544
  %v571 = vpack.c.b16 %v547, %v546
  %596 = vmatpush.bf16.msra.mxu0 %v555
  %597 = vmatpush.bf16.msra.mxu0 %v554
  %598 = vmatpush.bf16.msra.mxu0 %v553
  %599 = vmatpush.bf16.msra.mxu0 %v552
  %600 = vmatpush.bf16.msra.mxu0 %v551
  %601 = vmatpush.bf16.msra.mxu0 %v550
  %602 = vmatpush.bf16.msra.mxu0 %v549
  %603 = vmatpush.bf16.msra.mxu0 %v548
  %604 = vmatmul.bf16.gmra.mxu0 %v449
  %v605 = vpop.f32.mrf.mxu0
  %v606 = vadd.f32 0.0, %v605
  %v607 = vpop.f32.mrf.mxu0
  %v608 = vadd.f32 0.0, %v607
  %609 = vdwg.mxu0
  %610 = vmatpush.bf16.msra.mxu0 %v563
  %611 = vmatpush.bf16.msra.mxu0 %v562
  %612 = vmatpush.bf16.msra.mxu0 %v561
  %613 = vmatpush.bf16.msra.mxu0 %v560
  %614 = vmatpush.bf16.msra.mxu0 %v559
  %615 = vmatpush.bf16.msra.mxu0 %v558
  %616 = vmatpush.bf16.msra.mxu0 %v557
  %617 = vmatpush.bf16.msra.mxu0 %v556
  %618 = vmatmul.bf16.gmra.mxu0 %v450
  %v619 = vpop.f32.mrf.mxu0
  %v620 = vadd.f32 %v606, %v619
  %v621 = vpop.f32.mrf.mxu0
  %v622 = vadd.f32 %v608, %v621
  %623 = vdwg.mxu0
  %624 = vmatpush.bf16.msra.mxu0 %v571
  %625 = vmatpush.bf16.msra.mxu0 %v570
  %626 = vmatpush.bf16.msra.mxu0 %v569
  %627 = vmatpush.bf16.msra.mxu0 %v568
  %628 = vmatpush.bf16.msra.mxu0 %v567
  %629 = vmatpush.bf16.msra.mxu0 %v566
  %630 = vmatpush.bf16.msra.mxu0 %v565
  %631 = vmatpush.bf16.msra.mxu0 %v564
  %632 = vmatmul.bf16.gmra.mxu0 %v451
  %v633 = vpop.f32.mrf.mxu0
  %v634 = vadd.f32 %v620, %v633
  %v635 = vpop.f32.mrf.mxu0
  %v636 = vadd.f32 %v622, %v635
  %637 = vdwg.mxu0
  %v638 = vadd.f32 %v634, %v636
  %v639 = vrot.slane %v638, 4
  %v640 = vadd.f32 %v638, %v639
  %v641 = vrot.slane %v640, 2
  %v642 = vadd.f32 %v640, %v641
  %v643 = vrot.slane %v642, 1
  %v644 = vadd.f32 %v642, %v643
  %645 = vrot.lane.b32.xlu0 %v644, 4
  %v646 = vpop.permute.xlu0 %645
  %v647 = vadd.f32 %v644, %v646
  %648 = vrot.lane.b32.xlu0 %v647, 8
  %v649 = vpop.permute.xlu0 %648
  %v650 = vadd.f32 %v647, %v649
  %651 = vrot.lane.b32.xlu0 %v650, 16
  %v652 = vpop.permute.xlu0 %651
  %v653 = vadd.f32 %v650, %v652
  %654 = vrot.lane.b32.xlu0 %v653, 32
  %v655 = vpop.permute.xlu0 %654
  %v656 = vadd.f32 %v653, %v655
  %657 = vrot.lane.b32.xlu0 %v656, 64
  %v658 = vpop.permute.xlu0 %657
  %v659 = vadd.f32 %v656, %v658
  %v660 = vmul.f32 %v659, 0.001953125
  %v661 = vperm.slane %v660, 0
  %v662 = vsub.f32 %v634, %v661
  %v663 = vsub.f32 %v636, %v661
  %v664 = vmul.f32 %v662, %v662
  %v665 = vmul.f32 %v663, %v663
  %v666 = vadd.f32 %v664, %v665
  %v667 = vrot.slane %v666, 4
  %v668 = vadd.f32 %v666, %v667
  %v669 = vrot.slane %v668, 2
  %v670 = vadd.f32 %v668, %v669
  %v671 = vrot.slane %v670, 1
  %v672 = vadd.f32 %v670, %v671
  %673 = vrot.lane.b32.xlu0 %v672, 4
  %v674 = vpop.permute.xlu0 %673
  %v675 = vadd.f32 %v672, %v674
  %676 = vrot.lane.b32.xlu0 %v675, 8
  %v677 = vpop.permute.xlu0 %676
  %v678 = vadd.f32 %v675, %v677
  %679 = vrot.lane.b32.xlu0 %v678, 16
  %v680 = vpop.permute.xlu0 %679
  %v681 = vadd.f32 %v678, %v680
  %682 = vrot.lane.b32.xlu0 %v681, 32
  %v683 = vpop.permute.xlu0 %682
  %v684 = vadd.f32 %v681, %v683
  %685 = vrot.lane.b32.xlu0 %v684, 64
  %v686 = vpop.permute.xlu0 %685
  %v687 = vadd.f32 %v684, %v686
  %v688 = vmul.f32 %v687, 0.001953125
  %v689 = vld [vmem:[%s5] sm:$0x1]
  %v690 = vadd.f32 %v688, 1e-05
  %v691 = vrsqrt.pop %v690
  %v692 = vmul.f32 %v691, %v690
  %v693 = vmul.f32 %v692, %v691
  %v694 = vmul.f32 0.5, %v693
  %v695 = vsub.f32 1.5, %v694
  %v696 = vmul.f32 %v691, %v695
  %vm697 = vweird.f32 %v690
  %vm698 = vweird.f32 %v691
  %vm699 = vmor %vm697, %vm698
  %v700 = vsel %vm699, %v691, %v696
  %v701 = vmul.f32 %v689, %v700
  %v702 = vld [vmem:[%s6] sm:$0x1]
  %v703 = vmul.f32 %v660, %v701
  %v704 = vsub.f32 %v702, %v703
  %v706 = vperm.slane %v701, 0
  %v708 = vmul.f32 %v634, %v706
  %v709 = vmul.f32 %v636, %v706
  %v711 = vperm.slane %v704, 0
  %v713 = vadd.f32 %v708, %v711
  %v714 = vadd.f32 %v709, %v711
  %v715 = vadd.f32 %v713, %v57
  %v716 = vadd.f32 %v714, %v58
  %v717 = vmax.f32 %v715, 0.0
  %v718 = vmax.f32 %v716, 0.0
  %719 = vst [vmem:[%s7] sm:$0xff] %v717
  %720 = vst [vmem:[%s7 + $0x8] sm:$0xff] %v718
  // Predicated region
  $region30: #{residual_block.1} parent=0 // pred_check
    _
  $region31: #{residual_block.1} parent=0 // pred_check_branch
    %722 = sbr.rel (0) target = $region33
  $region32: #{residual_block.1} parent=0 // pred_region
    _
  $region33: #{residual_block.1} parent=0 // pred_fallthru
    _
  // Predicated region
  $region34: #{residual_block.1} parent=0 // pred_check
    _
  $region35: #{residual_block.1} parent=0 // pred_check_branch
    %724 = sbr.rel (0) target = $region37
  $region36: #{residual_block.1} parent=0 // pred_region
    _
  $region37: #{residual_block.1} parent=0 // pred_fallthru
    _

</llo_original>
